<compile_context>
chip_gen: v5e
topology: v5e:2x2
jax: 0.10.0
libtpu: 0.0.40
codegen_flags: <defaults>
</compile_context>

<pallas_src>
import functools

import jax
import jax.numpy as jnp
from jax import lax
from jax.experimental import pallas as pl
from jax.experimental.pallas import tpu as pltpu


def _round_up(x, m):
    return ((x + m - 1) // m) * m


# ----------------------------------------------------------------------------
# Kernels
# ----------------------------------------------------------------------------
def _linear_eval_kernel(x_ref, w_ref, b_ref, o_ref):
    """Eval path: dropout(p=0) is identity. o = W @ x^T + b, stored (T, tm)."""
    x = x_ref[...]                                        # (tm, H)
    w = w_ref[...]                                        # (T, H)
    # einsum 'th,nh->tn': contract H on both operands -> lane-dense (T, tm) out.
    y = lax.dot_general(w, x, (((1,), (1,)), ((), ())),
                        preferred_element_type=jnp.float32)
    o_ref[...] = (y + b_ref[...]).astype(o_ref.dtype)


def _dropout_linear_train_kernel(x_ref, m_ref, w_ref, b_ref, o_ref):
    """Train path: inverted dropout (mask in {0, 2}) then linear, stored (T, tm)."""
    x = x_ref[...] * m_ref[...]                           # (tm, H)
    y = lax.dot_general(w_ref[...], x, (((1,), (1,)), ((), ())),
                        preferred_element_type=jnp.float32)
    o_ref[...] = (y + b_ref[...]).astype(o_ref.dtype)


# ----------------------------------------------------------------------------
# Wrapper
# ----------------------------------------------------------------------------
@functools.partial(jax.jit, static_argnames=("is_train", "tm"))
def sequence_label_forward(hidden, weight, bias, key, *, is_train, tm=4096):
    """hidden: (B, S, H) f32; weight: (T, H); bias: (T,); key: jax PRNG key."""
    B, S, H = hidden.shape
    T = weight.shape[0]
    N = B * S

    # Large row tile for HBM roofline; clamp for small inputs; keep a multiple
    # of 128 so the transposed output store stays lane-dense.
    tm_eff = min(tm, _round_up(N, 128))
    n_blocks = pl.cdiv(N, tm_eff)
    Np = n_blocks * tm_eff

    x = hidden.reshape(N, H)
    if Np != N:
        x = jnp.pad(x, ((0, Np - N), (0, 0)))

    b2 = bias.reshape(T, 1).astype(jnp.float32)

    grid = (n_blocks,)
    x_spec = pl.BlockSpec((tm_eff, H), lambda i: (i, 0))
    w_spec = pl.BlockSpec((T, H), lambda i: (0, 0))       # resident
    b_spec = pl.BlockSpec((T, 1), lambda i: (0, 0))       # resident
    o_spec = pl.BlockSpec((T, tm_eff), lambda i: (0, i))  # lane-dense store
    out_shape = jax.ShapeDtypeStruct((T, Np), hidden.dtype)
    cparams = pltpu.CompilerParams(dimension_semantics=("parallel",))

    if is_train:
        # Inverted dropout p=0.5: keep w/ prob 0.5, scale survivors by 2.
        # Mask drawn at the logical (N, H) shape so it is reproducible outside.
        keep = jax.random.bernoulli(key, 0.5, (N, H))
        scale = keep.astype(x.dtype) * jnp.asarray(2.0, x.dtype)
        if Np != N:
            scale = jnp.pad(scale, ((0, Np - N), (0, 0)))
        out_t = pl.pallas_call(
            _dropout_linear_train_kernel,
            out_shape=out_shape,
            grid=grid,
            in_specs=[x_spec, x_spec, w_spec, b_spec],
            out_specs=o_spec,
            compiler_params=cparams,
        )(x, scale, weight, b2)
    else:
        out_t = pl.pallas_call(
            _linear_eval_kernel,
            out_shape=out_shape,
            grid=grid,
            in_specs=[x_spec, w_spec, b_spec],
            out_specs=o_spec,
            compiler_params=cparams,
        )(x, weight, b2)

    out = out_t.T[:N]                                     # (N, T)
    return out.reshape(B, S, T)


# ----------------------------------------------------------------------------
# Main
# ----------------------------------------------------------------------------
if __name__ == "__main__":
    # Small shapes consistent with the module: hidden_dim=32, tagset_size=8.
    B, S, H, T = 2, 8, 32, 8

    key = jax.random.PRNGKey(0)
    k_x, k_w, k_b, k_drop = jax.random.split(key, 4)

    hidden = jax.random.normal(k_x, (B, S, H), dtype=jnp.float32)

    # Deterministic nn.Linear-style init: U(-1/sqrt(H), 1/sqrt(H)).
    bound = 1.0 / (H ** 0.5)
    weight = jax.random.uniform(k_w, (T, H), minval=-bound, maxval=bound,
                                dtype=jnp.float32)
    bias = jax.random.uniform(k_b, (T,), minval=-bound, maxval=bound,
                              dtype=jnp.float32)

    # --- Eval path (dropout is identity) ---
    out_eval = sequence_label_forward(hidden, weight, bias, k_drop,
                                      is_train=False)
    jax.block_until_ready(out_eval)
    ref_eval = jnp.einsum("bsh,th->bst", hidden, weight,
                          precision=lax.Precision.HIGHEST) + bias
    assert out_eval.shape == (B, S, T)
    assert jnp.allclose(out_eval, ref_eval, atol=1e-4, rtol=1e-4), "eval mismatch"

    # --- Train path (dropout p=0.5) — mask is reproducible from k_drop ---
    out_train = sequence_label_forward(hidden, weight, bias, k_drop,
                                       is_train=True)
    jax.block_until_ready(out_train)
    keep = jax.random.bernoulli(k_drop, 0.5, (B * S, H)).astype(jnp.float32) * 2.0
    dropped = hidden.reshape(-1, H) * keep
    ref_train = (jnp.einsum("nh,th->nt", dropped, weight,
                            precision=lax.Precision.HIGHEST) + bias).reshape(B, S, T)
    assert out_train.shape == (B, S, T)
    assert jnp.allclose(out_train, ref_train, atol=1e-4, rtol=1e-4), "train mismatch"

    print("KERNEL_OK")
</pallas_src>

<mosaic_0001>
module attributes {stable_mosaic.version = 11 : i64} {
  func.func @_linear_eval_kernel(%arg0: i32, %arg1: memref<128x32xf32, #tpu.memory_space<vmem>>, %arg2: memref<8x32xf32, #tpu.memory_space<vmem>>, %arg3: memref<8x1xf32, #tpu.memory_space<vmem>>, %arg4: memref<8x128xf32, #tpu.memory_space<vmem>>) attributes {dimension_semantics = [#tpu.dimension_semantics<parallel>], iteration_bounds = array<i64: 1>, scalar_prefetch = 0 : i64, scratch_operands = 0 : i64, tpu.core_type = #tpu.core_type<tc>, window_params = [{transform_indices = @transform_0, window_bounds = array<i64: 128, 32>}, {pipeline_mode = #tpu.pipeline_mode<synchronous>, transform_indices = @transform_1, window_bounds = array<i64: 8, 32>}, {pipeline_mode = #tpu.pipeline_mode<synchronous>, transform_indices = @transform_2, window_bounds = array<i64: 8, 1>}, {transform_indices = @transform_3, window_bounds = array<i64: 8, 128>}]} {
    %c0 = arith.constant 0 : index
    %c0_0 = arith.constant 0 : index
    %0 = vector.load %arg1[%c0, %c0_0] : memref<128x32xf32, #tpu.memory_space<vmem>>, vector<128x32xf32>
    %c0_1 = arith.constant 0 : index
    %c0_2 = arith.constant 0 : index
    %1 = vector.load %arg2[%c0_1, %c0_2] : memref<8x32xf32, #tpu.memory_space<vmem>>, vector<8x32xf32>
    %cst = arith.constant dense<0.000000e+00> : vector<8x128xf32>
    %2 = tpu.matmul %1, %0, %cst {dimension_numbers = #tpu.dot_dimension_numbers<[1], [1], [0], [0], [0, 0, 1, 0], [], []>} : vector<8x32xf32>, vector<128x32xf32>, vector<8x128xf32> -> vector<8x128xf32>
    %c0_3 = arith.constant 0 : index
    %c0_4 = arith.constant 0 : index
    %3 = vector.load %arg3[%c0_3, %c0_4] : memref<8x1xf32, #tpu.memory_space<vmem>>, vector<8x1xf32>
    %4 = vector.broadcast %3 : vector<8x1xf32> to vector<8x128xf32>
    %5 = arith.addf %2, %4 : vector<8x128xf32>
    %c0_5 = arith.constant 0 : index
    %c0_6 = arith.constant 0 : index
    %6 = vector.load %arg4[%c0_5, %c0_6] : memref<8x128xf32, #tpu.memory_space<vmem>>, vector<8x128xf32>
    tpu.vector_store %arg4[%c0_5, %c0_6], %5 {strides = array<i32>} : memref<8x128xf32, #tpu.memory_space<vmem>>, vector<8x128xf32>,
    return
  }
  func.func @transform_0(%arg0: i32) -> (i32, i32) {
    %c0_i32 = arith.constant 0 : i32
    %c0_i32_0 = arith.constant 0 : i32
    return %arg0, %c0_i32 : i32, i32
  }
  func.func @transform_1(%arg0: i32) -> (i32, i32) {
    %c0_i32 = arith.constant 0 : i32
    %c0_i32_0 = arith.constant 0 : i32
    %c0_i32_1 = arith.constant 0 : i32
    return %c0_i32, %c0_i32_0 : i32, i32
  }
  func.func @transform_2(%arg0: i32) -> (i32, i32) {
    %c0_i32 = arith.constant 0 : i32
    %c0_i32_0 = arith.constant 0 : i32
    %c0_i32_1 = arith.constant 0 : i32
    return %c0_i32, %c0_i32_0 : i32, i32
  }
  func.func @transform_3(%arg0: i32) -> (i32, i32) {
    %c0_i32 = arith.constant 0 : i32
    %c0_i32_0 = arith.constant 0 : i32
    return %c0_i32, %arg0 : i32, i32
  }
}

</mosaic_0001>

<llo_original>
// kernel: sequence_label_forward.1
$region0: #{sequence_label_forward.1}
  #allocation0 [shape = 'u32[]', space=smem, size = 0x4, offset = 0x4, fixed_abs, tag = 'smem constant byte address 0x4 - core index']
  #allocation1 [shape = 'u32[72,128]{1,0:T(1,128)}', space=vmem, size = 0x9000, scoped, tag = 'internal scratch']
  %s0 = inlined_call_operand.vmem [shape: f32[128,32], index: 0, kind: input, shape index: {}]
  %s1 = inlined_call_operand.vmem [shape: f32[8,32], index: 1, kind: input, shape index: {}]
  %s2 = inlined_call_operand.vmem [shape: f32[8,1], index: 2, kind: input, shape index: {}]
  %s3 = inlined_call_operand.vmem [shape: f32[8,128], index: 3, kind: output, shape index: {}]
  %s4 = sld [smem:[#allocation0]]
  $region22: #{sequence_label_forward.1} parent=0
    _
  %s6 = ssub.s32 1, %s4
  %s7 = scalar_select 0, %s6, %s4
  // Predicated region
  $region2: #{sequence_label_forward.1} parent=0 // pred_check
    _
  $region3: #{sequence_label_forward.1} parent=0 // pred_check_branch
    %9 = sbr.rel (0) target = $region5
  $region4: #{sequence_label_forward.1} parent=0 // pred_region
    _
  $region5: #{sequence_label_forward.1} parent=0 // pred_fallthru
    _
  // Predicated region
  $region6: #{sequence_label_forward.1} parent=0 // pred_check
    _
  $region7: #{sequence_label_forward.1} parent=0 // pred_check_branch
    %11 = sbr.rel (0) target = $region9
  $region8: #{sequence_label_forward.1} parent=0 // pred_region
    _
  $region9: #{sequence_label_forward.1} parent=0 // pred_fallthru
    _
  // Predicated region
  $region10: #{sequence_label_forward.1} parent=0 // pred_check
    _
  $region11: #{sequence_label_forward.1} parent=0 // pred_check_branch
    %13 = sbr.rel (0) target = $region13
  $region12: #{sequence_label_forward.1} parent=0 // pred_region
    _
  $region13: #{sequence_label_forward.1} parent=0 // pred_fallthru
    _
  %v14 = vld [vmem:[%s0] sm:$0xff]
  %v15 = vld [vmem:[%s0 + $0x8] sm:$0xff]
  %v16 = vld [vmem:[%s0 + $0x10] sm:$0xff]
  %v17 = vld [vmem:[%s0 + $0x18] sm:$0xff]
  %v18 = vld [vmem:[%s0 + $0x20] sm:$0xff]
  %v19 = vld [vmem:[%s0 + $0x28] sm:$0xff]
  %v20 = vld [vmem:[%s0 + $0x30] sm:$0xff]
  %v21 = vld [vmem:[%s0 + $0x38] sm:$0xff]
  %v22 = vld [vmem:[%s0 + $0x40] sm:$0xff]
  %v23 = vld [vmem:[%s0 + $0x48] sm:$0xff]
  %v24 = vld [vmem:[%s0 + $0x50] sm:$0xff]
  %v25 = vld [vmem:[%s0 + $0x58] sm:$0xff]
  %v26 = vld [vmem:[%s0 + $0x60] sm:$0xff]
  %v27 = vld [vmem:[%s0 + $0x68] sm:$0xff]
  %v28 = vld [vmem:[%s0 + $0x70] sm:$0xff]
  %v29 = vld [vmem:[%s0 + $0x78] sm:$0xff]
  %v30 = vld [vmem:[%s1] sm:$0xff]
  %v31 = vld [vmem:[%s2] sm:$0xff]
  %33 = vset.pattern.permute.xlu0 0
  %34 = vperm.xlu0 %33, %v31
  %v35 = vpop.permute.xlu0 %34
  %vm37 = vcmask 261120
  %v39 = vsel %vm37, %v30, 0
  %v42 = vsel %vm37, %v14, 0
  %v45 = vsel %vm37, %v15, 0
  %v48 = vsel %vm37, %v16, 0
  %v51 = vsel %vm37, %v17, 0
  %v54 = vsel %vm37, %v18, 0
  %v57 = vsel %vm37, %v19, 0
  %v60 = vsel %vm37, %v20, 0
  %v63 = vsel %vm37, %v21, 0
  %v66 = vsel %vm37, %v22, 0
  %v69 = vsel %vm37, %v23, 0
  %v72 = vsel %vm37, %v24, 0
  %v75 = vsel %vm37, %v25, 0
  %v78 = vsel %vm37, %v26, 0
  %v81 = vsel %vm37, %v27, 0
  %v84 = vsel %vm37, %v28, 0
  %v87 = vsel %vm37, %v29, 0
  %89 = vmatpush.xpose.msra.mxu0 %v87
  %90 = vmatpush.xpose.msra.mxu0 %v84
  %91 = vmatpush.xpose.msra.mxu0 %v81
  %92 = vmatpush.xpose.msra.mxu0 %v78
  %93 = vmatpush.xpose.msra.mxu0 %v75
  %94 = vmatpush.xpose.msra.mxu0 %v72
  %95 = vmatpush.xpose.msra.mxu0 %v69
  %96 = vmatpush.xpose.msra.mxu0 %v66
  %97 = vmatpush.xpose.msra.mxu0 %v63
  %98 = vmatpush.xpose.msra.mxu0 %v60
  %99 = vmatpush.xpose.msra.mxu0 %v57
  %100 = vmatpush.xpose.msra.mxu0 %v54
  %101 = vmatpush.xpose.msra.mxu0 %v51
  %102 = vmatpush.xpose.msra.mxu0 %v48
  %103 = vmatpush.xpose.msra.mxu0 %v45
  %104 = vmatpush.xpose.msra.mxu0 %v42
  %105 = vmatmul.f32.gmra.mxu0 %v39
  %v106 = vpop.f32.mrf.mxu0
  %v107 = vadd.f32 %v35, %v106
  %108 = vdwg.mxu0
  %109 = vst [vmem:[%s3] sm:$0xff] %v107
  // Predicated region
  $region14: #{sequence_label_forward.1} parent=0 // pred_check
    _
  $region15: #{sequence_label_forward.1} parent=0 // pred_check_branch
    %111 = sbr.rel (0) target = $region17
  $region16: #{sequence_label_forward.1} parent=0 // pred_region
    _
  $region17: #{sequence_label_forward.1} parent=0 // pred_fallthru
    _
  // Predicated region
  $region18: #{sequence_label_forward.1} parent=0 // pred_check
    _
  $region19: #{sequence_label_forward.1} parent=0 // pred_check_branch
    %113 = sbr.rel (0) target = $region21
  $region20: #{sequence_label_forward.1} parent=0 // pred_region
    _
  $region21: #{sequence_label_forward.1} parent=0 // pred_fallthru
    _

</llo_original>
